<compile_context>
chip_gen: v7x
topology: tpu7x:2x2x1
jax: 0.10.0
libtpu: 0.0.40
codegen_flags: <defaults>
</compile_context>

<pallas_src>
import functools

import jax
import jax.numpy as jnp
from jax.experimental import pallas as pl
from jax.experimental.pallas import tpu as pltpu


def _round_up(x, m):
    return ((x + m - 1) // m) * m


def ffnn_kernel(x_ref, w1_ref, b1_ref, w2_ref, b2_ref, o_ref, *, approx_sigmoid):
    mat_dtype = w1_ref.dtype
    # Cast x to the matmul dtype in-kernel (no wrapper-side cast pass over x).
    x = x_ref[...].astype(mat_dtype)

    # fc1: MXU matmul with f32 accumulation; bias + sigmoid epilogue in f32.
    h = jnp.dot(x, w1_ref[...], preferred_element_type=jnp.float32)
    h = pl.reciprocal(1.0 + jnp.exp(-(h + b1_ref[...])), approx=approx_sigmoid)
    # dropout -> identity (eval mode)

    # fc2: hidden activation stays in vregs (no VMEM scratch round trip).
    y = jnp.dot(h.astype(mat_dtype), w2_ref[...],
                preferred_element_type=jnp.float32)
    y = pl.reciprocal(1.0 + jnp.exp(-(y + b2_ref[...])), approx=approx_sigmoid)
    # dropout -> identity (eval mode)

    o_ref[...] = y.astype(o_ref.dtype)


def prepare_ffnn_params(w1, b1, w2, b2, *, use_bf16=True):
    """Pad the hidden dim to lane width and cast weights ONCE (outside the hot path).

    w1: [input_size, hidden]  (fc1 weight, pre-transposed)
    b1: [hidden]
    w2: [hidden, input_size]  (fc2 weight, pre-transposed)
    b2: [input_size]

    Zero-padded hidden columns produce sigmoid(0) = 0.5 in h; the zero-padded
    W2 rows cancel them exactly, so the padding is mathematically inert.
    """
    in_size, hidden = w1.shape
    assert b1.shape == (hidden,)
    assert w2.shape == (hidden, in_size)
    assert b2.shape == (in_size,)

    hid_p = _round_up(hidden, 128)
    mat_dtype = jnp.bfloat16 if use_bf16 else jnp.float32

    w1_p = jnp.zeros((in_size, hid_p), mat_dtype).at[:, :hidden].set(
        w1.astype(mat_dtype))
    b1_p = jnp.zeros((1, hid_p), jnp.float32).at[0, :hidden].set(
        b1.astype(jnp.float32))
    w2_p = jnp.zeros((hid_p, in_size), mat_dtype).at[:hidden, :].set(
        w2.astype(mat_dtype))
    b2_p = b2.astype(jnp.float32).reshape(1, in_size)
    return w1_p, b1_p, w2_p, b2_p


@functools.partial(jax.jit, static_argnames=("block_b", "approx_sigmoid"))
def ffnn_forward(x, w1_p, b1_p, w2_p, b2_p, *, block_b=1024,
                 approx_sigmoid=True):
    """FFNN forward with pre-prepared (padded / cast) parameters.

    x:    [B, input_size]                      (unpadded, original dtype)
    w1_p: [input_size, hid_p]   b1_p: [1, hid_p]
    w2_p: [hid_p, input_size]   b2_p: [1, input_size]
    """
    B, in_size = x.shape
    hid_p = w1_p.shape[1]
    assert w1_p.shape == (in_size, hid_p)
    assert b1_p.shape == (1, hid_p)
    assert w2_p.shape == (hid_p, in_size)
    assert b2_p.shape == (1, in_size)

    out_dtype = x.dtype
    mat_sz = jnp.dtype(w1_p.dtype).itemsize
    x_sz = jnp.dtype(x.dtype).itemsize
    out_sz = jnp.dtype(out_dtype).itemsize

    # Batch tile: single grid step for B <= block_b; otherwise block_b-sized
    # tiles (multiple of 8 sublanes). Footprint stays far under any VMEM limit.
    tb = min(_round_up(B, 8), block_b)
    b_p = _round_up(B, tb)
    grid = (b_p // tb,)

    # Only touch x if the batch actually needs padding to a whole tile.
    x_in = x if b_p == B else jnp.zeros((b_p, in_size), x.dtype).at[:B].set(x)

    # --- VMEM budget (double-buffered x/out + resident weights + headroom). ---
    footprint = (
        2 * tb * in_size * x_sz         # x tiles (double buffered)
        + 2 * tb * in_size * out_sz     # out tiles (double buffered)
        + in_size * hid_p * mat_sz      # W1 (resident)
        + hid_p * in_size * mat_sz      # W2 (resident)
        + (hid_p + in_size) * 4         # biases (f32)
        + 2 * tb * hid_p * 4            # hidden activation / spill headroom
    )
    vmem_limit = int(min(max(4 * footprint, 16 * 1024 * 1024),
                         32 * 1024 * 1024))

    # Advisory cost estimate for the XLA scheduler.
    cost = pl.CostEstimate(
        flops=2 * b_p * in_size * hid_p + 2 * b_p * hid_p * in_size,
        transcendentals=b_p * (hid_p + in_size),
        bytes_accessed=(b_p * in_size * x_sz
                        + (w1_p.size + w2_p.size) * mat_sz
                        + (b1_p.size + b2_p.size) * 4
                        + b_p * in_size * out_sz),
    )

    out = pl.pallas_call(
        functools.partial(ffnn_kernel, approx_sigmoid=approx_sigmoid),
        out_shape=jax.ShapeDtypeStruct((b_p, in_size), out_dtype),
        grid_spec=pltpu.PrefetchScalarGridSpec(
            num_scalar_prefetch=0,
            grid=grid,
            in_specs=[
                pl.BlockSpec((tb, in_size), lambda i: (i, 0)),     # x tile
                pl.BlockSpec((in_size, hid_p), lambda i: (0, 0)),  # W1 (resident)
                pl.BlockSpec((1, hid_p), lambda i: (0, 0)),        # b1
                pl.BlockSpec((hid_p, in_size), lambda i: (0, 0)),  # W2 (resident)
                pl.BlockSpec((1, in_size), lambda i: (0, 0)),      # b2
            ],
            out_specs=pl.BlockSpec((tb, in_size), lambda i: (i, 0)),
        ),
        compiler_params=pltpu.CompilerParams(
            dimension_semantics=("parallel",),
            vmem_limit_bytes=vmem_limit,
        ),
        cost_estimate=cost,
    )(x_in, w1_p, b1_p, w2_p, b2_p)

    return out if b_p == B else out[:B]


def ffnn_reference(x, w1, b1, w2, b2):
    h = jax.nn.sigmoid(x @ w1 + b1)
    return jax.nn.sigmoid(h @ w2 + b2)


if __name__ == "__main__":
    # Shapes implied by the module (Linear over the last feature dim).
    batch = 256
    input_size = 32
    hidden_size = 64
    dropout_p = 0.5  # unused in eval mode

    key = jax.random.PRNGKey(0)
    kx, k1, k2, k3, k4 = jax.random.split(key, 5)

    x = jax.random.normal(kx, (batch, input_size), dtype=jnp.float32)

    # Deterministic parameter init (PyTorch-style uniform bounds, fixed seed).
    bound1 = 1.0 / (input_size ** 0.5)
    bound2 = 1.0 / (hidden_size ** 0.5)
    # Stored pre-transposed: [in_features, out_features]
    w1 = jax.random.uniform(k1, (input_size, hidden_size), jnp.float32,
                            -bound1, bound1)
    b1 = jax.random.uniform(k2, (hidden_size,), jnp.float32, -bound1, bound1)
    w2 = jax.random.uniform(k3, (hidden_size, input_size), jnp.float32,
                            -bound2, bound2)
    b2 = jax.random.uniform(k4, (input_size,), jnp.float32, -bound2, bound2)

    ref = ffnn_reference(x, w1, b1, w2, b2)

    # f32 path (exact sigmoid): tight match against the f32 reference.
    params_f32 = prepare_ffnn_params(w1, b1, w2, b2, use_bf16=False)
    out_f32 = jax.block_until_ready(
        ffnn_forward(x, *params_f32, approx_sigmoid=False))
    assert out_f32.shape == (batch, input_size)
    assert jnp.allclose(out_f32, ref, atol=1e-5, rtol=1e-5), "f32 mismatch"

    # bf16 MXU fast path (default): looser tolerance for bf16 operands +
    # approx EUP reciprocal.
    params_bf16 = prepare_ffnn_params(w1, b1, w2, b2, use_bf16=True)
    out_bf16 = jax.block_until_ready(
        ffnn_forward(x, *params_bf16, approx_sigmoid=True))
    assert out_bf16.shape == (batch, input_size)
    assert jnp.allclose(out_bf16, ref, atol=2e-2, rtol=0.0), "bf16 mismatch"

    print("KERNEL_OK")
</pallas_src>

<mosaic_0001>
module attributes {stable_mosaic.version = 11 : i64} {
  func.func @ffnn_kernel(%arg0: i32, %arg1: memref<256x32xf32, #tpu.memory_space<vmem>>, %arg2: memref<32x128xf32, #tpu.memory_space<vmem>>, %arg3: memref<1x128xf32, #tpu.memory_space<vmem>>, %arg4: memref<128x32xf32, #tpu.memory_space<vmem>>, %arg5: memref<1x32xf32, #tpu.memory_space<vmem>>, %arg6: memref<256x32xf32, #tpu.memory_space<vmem>>) attributes {dimension_semantics = [#tpu.dimension_semantics<parallel>], iteration_bounds = array<i64: 1>, scalar_prefetch = 0 : i64, scratch_operands = 0 : i64, tpu.core_type = #tpu.core_type<tc>, window_params = [{transform_indices = @transform_0, window_bounds = array<i64: 256, 32>}, {pipeline_mode = #tpu.pipeline_mode<synchronous>, transform_indices = @transform_1, window_bounds = array<i64: 32, 128>}, {pipeline_mode = #tpu.pipeline_mode<synchronous>, transform_indices = @transform_2, window_bounds = array<i64: 1, 128>}, {pipeline_mode = #tpu.pipeline_mode<synchronous>, transform_indices = @transform_3, window_bounds = array<i64: 128, 32>}, {pipeline_mode = #tpu.pipeline_mode<synchronous>, transform_indices = @transform_4, window_bounds = array<i64: 1, 32>}, {transform_indices = @transform_5, window_bounds = array<i64: 256, 32>}]} {
    %c0 = arith.constant 0 : index
    %c0_0 = arith.constant 0 : index
    %0 = vector.load %arg1[%c0, %c0_0] : memref<256x32xf32, #tpu.memory_space<vmem>>, vector<256x32xf32>
    %c0_1 = arith.constant 0 : index
    %c0_2 = arith.constant 0 : index
    %1 = vector.load %arg2[%c0_1, %c0_2] : memref<32x128xf32, #tpu.memory_space<vmem>>, vector<32x128xf32>
    %cst = arith.constant dense<0.000000e+00> : vector<256x128xf32>
    %2 = tpu.matmul %0, %1, %cst {dimension_numbers = #tpu.dot_dimension_numbers<[1], [0], [0], [1], [0, 0, 1, 1], [], []>} : vector<256x32xf32>, vector<32x128xf32>, vector<256x128xf32> -> vector<256x128xf32>
    %c0_3 = arith.constant 0 : index
    %c0_4 = arith.constant 0 : index
    %3 = vector.load %arg3[%c0_3, %c0_4] : memref<1x128xf32, #tpu.memory_space<vmem>>, vector<1x128xf32>
    %4 = vector.broadcast %3 : vector<1x128xf32> to vector<256x128xf32>
    %5 = arith.addf %2, %4 : vector<256x128xf32>
    %cst_5 = arith.constant 0.000000e+00 : f32
    %6 = vector.broadcast %cst_5 : f32 to vector<256x128xf32>
    %7 = arith.subf %6, %5 : vector<256x128xf32>
    %8 = math.exp %7 : vector<256x128xf32>
    %cst_6 = arith.constant 1.000000e+00 : f32
    %9 = vector.broadcast %cst_6 : f32 to vector<256x128xf32>
    %10 = arith.addf %9, %8 : vector<256x128xf32>
    %11 = tpu.reciprocal %10 : vector<256x128xf32> -> vector<256x128xf32>
    %c0_7 = arith.constant 0 : index
    %c0_8 = arith.constant 0 : index
    %12 = vector.load %arg4[%c0_7, %c0_8] : memref<128x32xf32, #tpu.memory_space<vmem>>, vector<128x32xf32>
    %cst_9 = arith.constant dense<0.000000e+00> : vector<256x32xf32>
    %13 = tpu.matmul %11, %12, %cst_9 {dimension_numbers = #tpu.dot_dimension_numbers<[1], [0], [0], [1], [0, 0, 1, 1], [], []>} : vector<256x128xf32>, vector<128x32xf32>, vector<256x32xf32> -> vector<256x32xf32>
    %c0_10 = arith.constant 0 : index
    %c0_11 = arith.constant 0 : index
    %14 = vector.load %arg5[%c0_10, %c0_11] : memref<1x32xf32, #tpu.memory_space<vmem>>, vector<1x32xf32>
    %15 = vector.broadcast %14 : vector<1x32xf32> to vector<256x32xf32>
    %16 = arith.addf %13, %15 : vector<256x32xf32>
    %cst_12 = arith.constant 0.000000e+00 : f32
    %17 = vector.broadcast %cst_12 : f32 to vector<256x32xf32>
    %18 = arith.subf %17, %16 : vector<256x32xf32>
    %19 = math.exp %18 : vector<256x32xf32>
    %cst_13 = arith.constant 1.000000e+00 : f32
    %20 = vector.broadcast %cst_13 : f32 to vector<256x32xf32>
    %21 = arith.addf %20, %19 : vector<256x32xf32>
    %22 = tpu.reciprocal %21 : vector<256x32xf32> -> vector<256x32xf32>
    %c0_14 = arith.constant 0 : index
    %c0_15 = arith.constant 0 : index
    %23 = vector.load %arg6[%c0_14, %c0_15] : memref<256x32xf32, #tpu.memory_space<vmem>>, vector<256x32xf32>
    tpu.vector_store %arg6[%c0_14, %c0_15], %22 {strides = array<i32>} : memref<256x32xf32, #tpu.memory_space<vmem>>, vector<256x32xf32>,
    return
  }
  func.func @transform_0(%arg0: i32) -> (i32, i32) {
    %c0_i32 = arith.constant 0 : i32
    %c0_i32_0 = arith.constant 0 : i32
    return %arg0, %c0_i32 : i32, i32
  }
  func.func @transform_1(%arg0: i32) -> (i32, i32) {
    %c0_i32 = arith.constant 0 : i32
    %c0_i32_0 = arith.constant 0 : i32
    %c0_i32_1 = arith.constant 0 : i32
    return %c0_i32, %c0_i32_0 : i32, i32
  }
  func.func @transform_2(%arg0: i32) -> (i32, i32) {
    %c0_i32 = arith.constant 0 : i32
    %c0_i32_0 = arith.constant 0 : i32
    %c0_i32_1 = arith.constant 0 : i32
    return %c0_i32, %c0_i32_0 : i32, i32
  }
  func.func @transform_3(%arg0: i32) -> (i32, i32) {
    %c0_i32 = arith.constant 0 : i32
    %c0_i32_0 = arith.constant 0 : i32
    %c0_i32_1 = arith.constant 0 : i32
    return %c0_i32, %c0_i32_0 : i32, i32
  }
  func.func @transform_4(%arg0: i32) -> (i32, i32) {
    %c0_i32 = arith.constant 0 : i32
    %c0_i32_0 = arith.constant 0 : i32
    %c0_i32_1 = arith.constant 0 : i32
    return %c0_i32, %c0_i32_0 : i32, i32
  }
  func.func @transform_5(%arg0: i32) -> (i32, i32) {
    %c0_i32 = arith.constant 0 : i32
    %c0_i32_0 = arith.constant 0 : i32
    return %arg0, %c0_i32 : i32, i32
  }
}

</mosaic_0001>

<llo_original>
// kernel: ffnn_forward.1
$region0: #{ffnn_forward.1}
  #allocation0 [shape = 'u32[]', space=smem, size = 0x4, offset = 0x4, fixed_abs, tag = 'smem constant byte address 0x4 - core index']
  #allocation1 [shape = 'u32[144,128]{1,0:T(1,128)}', space=vmem, size = 0x12000, scoped, tag = 'internal scratch']
  %s0 = inlined_call_operand.vmem [shape: f32[256,32], index: 0, kind: input, shape index: {}]
  %s1 = inlined_call_operand.vmem [shape: f32[32,128], index: 1, kind: input, shape index: {}]
  %s2 = inlined_call_operand.vmem [shape: f32[1,128], index: 2, kind: input, shape index: {}]
  %s3 = inlined_call_operand.vmem [shape: f32[128,32], index: 3, kind: input, shape index: {}]
  %s4 = inlined_call_operand.vmem [shape: f32[1,32], index: 4, kind: input, shape index: {}]
  %s5 = inlined_call_operand.vmem [shape: f32[256,32], index: 5, kind: output, shape index: {}]
  %s6 = sld [smem:[#allocation0]]
  $region30: #{ffnn_forward.1} parent=0
    _
  %s8 = ssub.s32 1, %s6
  %s9 = scalar_select 0, %s8, %s6
  // Predicated region
  $region2: #{ffnn_forward.1} parent=0 // pred_check
    _
  $region3: #{ffnn_forward.1} parent=0 // pred_check_branch
    %11 = sbr.rel (0) target = $region5
  $region4: #{ffnn_forward.1} parent=0 // pred_region
    _
  $region5: #{ffnn_forward.1} parent=0 // pred_fallthru
    _
  // Predicated region
  $region6: #{ffnn_forward.1} parent=0 // pred_check
    _
  $region7: #{ffnn_forward.1} parent=0 // pred_check_branch
    %13 = sbr.rel (0) target = $region9
  $region8: #{ffnn_forward.1} parent=0 // pred_region
    _
  $region9: #{ffnn_forward.1} parent=0 // pred_fallthru
    _
  // Predicated region
  $region10: #{ffnn_forward.1} parent=0 // pred_check
    _
  $region11: #{ffnn_forward.1} parent=0 // pred_check_branch
    %15 = sbr.rel (0) target = $region13
  $region12: #{ffnn_forward.1} parent=0 // pred_region
    _
  $region13: #{ffnn_forward.1} parent=0 // pred_fallthru
    _
  // Predicated region
  $region14: #{ffnn_forward.1} parent=0 // pred_check
    _
  $region15: #{ffnn_forward.1} parent=0 // pred_check_branch
    %17 = sbr.rel (0) target = $region17
  $region16: #{ffnn_forward.1} parent=0 // pred_region
    _
  $region17: #{ffnn_forward.1} parent=0 // pred_fallthru
    _
  // Predicated region
  $region18: #{ffnn_forward.1} parent=0 // pred_check
    _
  $region19: #{ffnn_forward.1} parent=0 // pred_check_branch
    %19 = sbr.rel (0) target = $region21
  $region20: #{ffnn_forward.1} parent=0 // pred_region
    _
  $region21: #{ffnn_forward.1} parent=0 // pred_fallthru
    _
  %v20 = vld [vmem:[%s0] sm:$0xff]
  %v21 = vld [vmem:[%s0 + $0x8] sm:$0xff]
  %v22 = vld [vmem:[%s0 + $0x10] sm:$0xff]
  %v23 = vld [vmem:[%s0 + $0x18] sm:$0xff]
  %v24 = vld [vmem:[%s0 + $0x20] sm:$0xff]
  %v25 = vld [vmem:[%s0 + $0x28] sm:$0xff]
  %v26 = vld [vmem:[%s0 + $0x30] sm:$0xff]
  %v27 = vld [vmem:[%s0 + $0x38] sm:$0xff]
  %v28 = vld [vmem:[%s0 + $0x40] sm:$0xff]
  %v29 = vld [vmem:[%s0 + $0x48] sm:$0xff]
  %v30 = vld [vmem:[%s0 + $0x50] sm:$0xff]
  %v31 = vld [vmem:[%s0 + $0x58] sm:$0xff]
  %v32 = vld [vmem:[%s0 + $0x60] sm:$0xff]
  %v33 = vld [vmem:[%s0 + $0x68] sm:$0xff]
  %v34 = vld [vmem:[%s0 + $0x70] sm:$0xff]
  %v35 = vld [vmem:[%s0 + $0x78] sm:$0xff]
  %v36 = vld [vmem:[%s0 + $0x80] sm:$0xff]
  %v37 = vld [vmem:[%s0 + $0x88] sm:$0xff]
  %v38 = vld [vmem:[%s0 + $0x90] sm:$0xff]
  %v39 = vld [vmem:[%s0 + $0x98] sm:$0xff]
  %v40 = vld [vmem:[%s0 + $0xa0] sm:$0xff]
  %v41 = vld [vmem:[%s0 + $0xa8] sm:$0xff]
  %v42 = vld [vmem:[%s0 + $0xb0] sm:$0xff]
  %v43 = vld [vmem:[%s0 + $0xb8] sm:$0xff]
  %v44 = vld [vmem:[%s0 + $0xc0] sm:$0xff]
  %v45 = vld [vmem:[%s0 + $0xc8] sm:$0xff]
  %v46 = vld [vmem:[%s0 + $0xd0] sm:$0xff]
  %v47 = vld [vmem:[%s0 + $0xd8] sm:$0xff]
  %v48 = vld [vmem:[%s0 + $0xe0] sm:$0xff]
  %v49 = vld [vmem:[%s0 + $0xe8] sm:$0xff]
  %v50 = vld [vmem:[%s0 + $0xf0] sm:$0xff]
  %v51 = vld [vmem:[%s0 + $0xf8] sm:$0xff]
  %v52 = vld [vmem:[%s1] sm:$0xff]
  %v53 = vld [vmem:[%s1 + $0x8] sm:$0xff]
  %v54 = vld [vmem:[%s1 + $0x10] sm:$0xff]
  %v55 = vld [vmem:[%s1 + $0x18] sm:$0xff]
  %v56 = vld [vmem:[%s2] sm:$0x1]
  %v58 = vlaneseq
  %v59 = vshrl.u32 %v58, 7
  %v60 = vsub.s32 0, %v59
  %v61 = vrot.slane %v56, %v60
  %vm63 = vcmask 261120
  %v65 = vsel %vm63, %v20, 0
  %v68 = vsel %vm63, %v21, 0
  %v71 = vsel %vm63, %v22, 0
  %v74 = vsel %vm63, %v23, 0
  %v77 = vsel %vm63, %v24, 0
  %v80 = vsel %vm63, %v25, 0
  %v83 = vsel %vm63, %v26, 0
  %v86 = vsel %vm63, %v27, 0
  %v89 = vsel %vm63, %v28, 0
  %v92 = vsel %vm63, %v29, 0
  %v95 = vsel %vm63, %v30, 0
  %v98 = vsel %vm63, %v31, 0
  %v101 = vsel %vm63, %v32, 0
  %v104 = vsel %vm63, %v33, 0
  %v107 = vsel %vm63, %v34, 0
  %v110 = vsel %vm63, %v35, 0
  %v113 = vsel %vm63, %v36, 0
  %v116 = vsel %vm63, %v37, 0
  %v119 = vsel %vm63, %v38, 0
  %v122 = vsel %vm63, %v39, 0
  %v125 = vsel %vm63, %v40, 0
  %v128 = vsel %vm63, %v41, 0
  %v131 = vsel %vm63, %v42, 0
  %v134 = vsel %vm63, %v43, 0
  %v137 = vsel %vm63, %v44, 0
  %v140 = vsel %vm63, %v45, 0
  %v143 = vsel %vm63, %v46, 0
  %v146 = vsel %vm63, %v47, 0
  %v149 = vsel %vm63, %v48, 0
  %v152 = vsel %vm63, %v49, 0
  %v155 = vsel %vm63, %v50, 0
  %v158 = vsel %vm63, %v51, 0
  %160 = vmatprep.subr.mxu0 0.0
  %161 = vmatpush1.msra.mxu0 %v52
  %162 = vmatprep.subr.mxu0 0.0
  %163 = vmatpush1.msra.mxu0 %v53
  %164 = vmatprep.subr.mxu0 0.0
  %165 = vmatpush1.msra.mxu0 %v54
  %166 = vmatprep.subr.mxu0 0.0
  %167 = vmatpush1.msra.mxu0 %v55
  %168 = vmatprep.subr.mxu0 0.0
  %169 = vmatpush1.msra.mxu0 0.0
  %170 = vmatprep.subr.mxu0 0.0
  %171 = vmatpush1.msra.mxu0 0.0
  %172 = vmatprep.subr.mxu0 0.0
  %173 = vmatpush1.msra.mxu0 0.0
  %174 = vmatprep.subr.mxu0 0.0
  %175 = vmatpush1.msra.mxu0 0.0
  %176 = vmatprep.subr.mxu0 0.0
  %177 = vmatpush1.msra.mxu0 0.0
  %178 = vmatprep.subr.mxu0 0.0
  %179 = vmatpush1.msra.mxu0 0.0
  %180 = vmatprep.subr.mxu0 0.0
  %181 = vmatpush1.msra.mxu0 0.0
  %182 = vmatprep.subr.mxu0 0.0
  %183 = vmatpush1.msra.mxu0 0.0
  %184 = vmatprep.subr.mxu0 0.0
  %185 = vmatpush1.msra.mxu0 0.0
  %186 = vmatprep.subr.mxu0 0.0
  %187 = vmatpush1.msra.mxu0 0.0
  %188 = vmatprep.subr.mxu0 0.0
  %189 = vmatpush1.msra.mxu0 0.0
  %190 = vmatprep.subr.mxu0 0.0
  %191 = vmatpush1.msra.mxu0 0.0
  %192 = vmatprep.subr.mxu0 0.0
  %193 = vmatpush1.msra.mxu0 0.0
  %194 = vmatprep.subr.mxu0 0.0
  %195 = vmatpush1.msra.mxu0 0.0
  %196 = vmatprep.subr.mxu0 0.0
  %197 = vmatpush1.msra.mxu0 0.0
  %198 = vmatprep.subr.mxu0 0.0
  %199 = vmatpush1.msra.mxu0 0.0
  %200 = vmatprep.subr.mxu0 0.0
  %201 = vmatpush1.msra.mxu0 0.0
  %202 = vmatprep.subr.mxu0 0.0
  %203 = vmatpush1.msra.mxu0 0.0
  %204 = vmatprep.subr.mxu0 0.0
  %205 = vmatpush1.msra.mxu0 0.0
  %206 = vmatprep.subr.mxu0 0.0
  %207 = vmatpush1.msra.mxu0 0.0
  %208 = vmatprep.subr.mxu0 0.0
  %209 = vmatpush1.msra.mxu0 0.0
  %210 = vmatprep.subr.mxu0 0.0
  %211 = vmatpush1.msra.mxu0 0.0
  %212 = vmatprep.subr.mxu0 0.0
  %213 = vmatpush1.msra.mxu0 0.0
  %214 = vmatprep.subr.mxu0 0.0
  %215 = vmatpush1.msra.mxu0 0.0
  %216 = vmatprep.subr.mxu0 0.0
  %217 = vmatpush1.msra.mxu0 0.0
  %218 = vmatprep.subr.mxu0 0.0
  %219 = vmatpush1.msra.mxu0 0.0
  %220 = vmatprep.subr.mxu0 0.0
  %221 = vmatpush1.msra.mxu0 0.0
  %222 = vmatprep.subr.mxu0 0.0
  %223 = vmatpush1.msra.mxu0 0.0
  %224 = vmatprep.mubr.f32.mxu0 0.0
  %225 = vmatmul.mubr.f32.gmra.mrb[0].mxu0 %v65
  %v226 = vpop.f32.mrb[0].mxu0
  %v227 = vadd.f32 %v61, %v226
  %v228 = vpop.f32.mrb[0].mxu0
  %229 = vmatprep.mubr.f32.mxu0 0.0
  %230 = vmatmul.mubr.f32.gmra.mrb[0].mxu0 %v68
  %v231 = vpop.f32.mrb[0].mxu0
  %v232 = vadd.f32 %v61, %v231
  %v233 = vpop.f32.mrb[0].mxu0
  %234 = vmatprep.mubr.f32.mxu0 0.0
  %235 = vmatmul.mubr.f32.gmra.mrb[0].mxu0 %v71
  %v236 = vpop.f32.mrb[0].mxu0
  %v237 = vadd.f32 %v61, %v236
  %v238 = vpop.f32.mrb[0].mxu0
  %239 = vmatprep.mubr.f32.mxu0 0.0
  %240 = vmatmul.mubr.f32.gmra.mrb[0].mxu0 %v74
  %v241 = vpop.f32.mrb[0].mxu0
  %v242 = vadd.f32 %v61, %v241
  %v243 = vpop.f32.mrb[0].mxu0
  %244 = vmatprep.mubr.f32.mxu0 0.0
  %245 = vmatmul.mubr.f32.gmra.mrb[0].mxu0 %v77
  %v246 = vpop.f32.mrb[0].mxu0
  %v247 = vadd.f32 %v61, %v246
  %v248 = vpop.f32.mrb[0].mxu0
  %249 = vmatprep.mubr.f32.mxu0 0.0
  %250 = vmatmul.mubr.f32.gmra.mrb[0].mxu0 %v80
  %v251 = vpop.f32.mrb[0].mxu0
  %v252 = vadd.f32 %v61, %v251
  %v253 = vpop.f32.mrb[0].mxu0
  %254 = vmatprep.mubr.f32.mxu0 0.0
  %255 = vmatmul.mubr.f32.gmra.mrb[0].mxu0 %v83
  %v256 = vpop.f32.mrb[0].mxu0
  %v257 = vadd.f32 %v61, %v256
  %v258 = vpop.f32.mrb[0].mxu0
  %259 = vmatprep.mubr.f32.mxu0 0.0
  %260 = vmatmul.mubr.f32.gmra.mrb[0].mxu0 %v86
  %v261 = vpop.f32.mrb[0].mxu0
  %v262 = vadd.f32 %v61, %v261
  %v263 = vpop.f32.mrb[0].mxu0
  %264 = vmatprep.mubr.f32.mxu0 0.0
  %265 = vmatmul.mubr.f32.gmra.mrb[0].mxu0 %v89
  %v266 = vpop.f32.mrb[0].mxu0
  %v267 = vadd.f32 %v61, %v266
  %v268 = vpop.f32.mrb[0].mxu0
  %269 = vmatprep.mubr.f32.mxu0 0.0
  %270 = vmatmul.mubr.f32.gmra.mrb[0].mxu0 %v92
  %v271 = vpop.f32.mrb[0].mxu0
  %v272 = vadd.f32 %v61, %v271
  %v273 = vpop.f32.mrb[0].mxu0
  %274 = vmatprep.mubr.f32.mxu0 0.0
  %275 = vmatmul.mubr.f32.gmra.mrb[0].mxu0 %v95
  %v276 = vpop.f32.mrb[0].mxu0
  %v277 = vadd.f32 %v61, %v276
  %v278 = vpop.f32.mrb[0].mxu0
  %279 = vmatprep.mubr.f32.mxu0 0.0
  %280 = vmatmul.mubr.f32.gmra.mrb[0].mxu0 %v98
  %v281 = vpop.f32.mrb[0].mxu0
  %v282 = vadd.f32 %v61, %v281
  %v283 = vpop.f32.mrb[0].mxu0
  %284 = vmatprep.mubr.f32.mxu0 0.0
  %285 = vmatmul.mubr.f32.gmra.mrb[0].mxu0 %v101
  %v286 = vpop.f32.mrb[0].mxu0
  %v287 = vadd.f32 %v61, %v286
  %v288 = vpop.f32.mrb[0].mxu0
  %289 = vmatprep.mubr.f32.mxu0 0.0
  %290 = vmatmul.mubr.f32.gmra.mrb[0].mxu0 %v104
  %v291 = vpop.f32.mrb[0].mxu0
  %v292 = vadd.f32 %v61, %v291
  %v293 = vpop.f32.mrb[0].mxu0
  %294 = vmatprep.mubr.f32.mxu0 0.0
  %295 = vmatmul.mubr.f32.gmra.mrb[0].mxu0 %v107
  %v296 = vpop.f32.mrb[0].mxu0
  %v297 = vadd.f32 %v61, %v296
  %v298 = vpop.f32.mrb[0].mxu0
  %299 = vmatprep.mubr.f32.mxu0 0.0
  %300 = vmatmul.mubr.f32.gmra.mrb[0].mxu0 %v110
  %v301 = vpop.f32.mrb[0].mxu0
  %v302 = vadd.f32 %v61, %v301
  %v303 = vpop.f32.mrb[0].mxu0
  %304 = vmatprep.mubr.f32.mxu0 0.0
  %305 = vmatmul.mubr.f32.gmra.mrb[0].mxu0 %v113
  %v306 = vpop.f32.mrb[0].mxu0
  %v307 = vadd.f32 %v61, %v306
  %v308 = vpop.f32.mrb[0].mxu0
  %309 = vmatprep.mubr.f32.mxu0 0.0
  %310 = vmatmul.mubr.f32.gmra.mrb[0].mxu0 %v116
  %v311 = vpop.f32.mrb[0].mxu0
  %v312 = vadd.f32 %v61, %v311
  %v313 = vpop.f32.mrb[0].mxu0
  %314 = vmatprep.mubr.f32.mxu0 0.0
  %315 = vmatmul.mubr.f32.gmra.mrb[0].mxu0 %v119
  %v316 = vpop.f32.mrb[0].mxu0
  %v317 = vadd.f32 %v61, %v316
  %v318 = vpop.f32.mrb[0].mxu0
  %319 = vmatprep.mubr.f32.mxu0 0.0
  %320 = vmatmul.mubr.f32.gmra.mrb[0].mxu0 %v122
  %v321 = vpop.f32.mrb[0].mxu0
  %v322 = vadd.f32 %v61, %v321
  %v323 = vpop.f32.mrb[0].mxu0
  %324 = vmatprep.mubr.f32.mxu0 0.0
  %325 = vmatmul.mubr.f32.gmra.mrb[0].mxu0 %v125
  %v326 = vpop.f32.mrb[0].mxu0
  %v327 = vadd.f32 %v61, %v326
  %v328 = vpop.f32.mrb[0].mxu0
  %329 = vmatprep.mubr.f32.mxu0 0.0
  %330 = vmatmul.mubr.f32.gmra.mrb[0].mxu0 %v128
  %v331 = vpop.f32.mrb[0].mxu0
  %v332 = vadd.f32 %v61, %v331
  %v333 = vpop.f32.mrb[0].mxu0
  %334 = vmatprep.mubr.f32.mxu0 0.0
  %335 = vmatmul.mubr.f32.gmra.mrb[0].mxu0 %v131
  %v336 = vpop.f32.mrb[0].mxu0
  %v337 = vadd.f32 %v61, %v336
  %v338 = vpop.f32.mrb[0].mxu0
  %339 = vmatprep.mubr.f32.mxu0 0.0
  %340 = vmatmul.mubr.f32.gmra.mrb[0].mxu0 %v134
  %v341 = vpop.f32.mrb[0].mxu0
  %v342 = vadd.f32 %v61, %v341
  %v343 = vpop.f32.mrb[0].mxu0
  %344 = vmatprep.mubr.f32.mxu0 0.0
  %345 = vmatmul.mubr.f32.gmra.mrb[0].mxu0 %v137
  %v346 = vpop.f32.mrb[0].mxu0
  %v347 = vadd.f32 %v61, %v346
  %v348 = vpop.f32.mrb[0].mxu0
  %349 = vmatprep.mubr.f32.mxu0 0.0
  %350 = vmatmul.mubr.f32.gmra.mrb[0].mxu0 %v140
  %v351 = vpop.f32.mrb[0].mxu0
  %v352 = vadd.f32 %v61, %v351
  %v353 = vpop.f32.mrb[0].mxu0
  %354 = vmatprep.mubr.f32.mxu0 0.0
  %355 = vmatmul.mubr.f32.gmra.mrb[0].mxu0 %v143
  %v356 = vpop.f32.mrb[0].mxu0
  %v357 = vadd.f32 %v61, %v356
  %v358 = vpop.f32.mrb[0].mxu0
  %359 = vmatprep.mubr.f32.mxu0 0.0
  %360 = vmatmul.mubr.f32.gmra.mrb[0].mxu0 %v146
  %v361 = vpop.f32.mrb[0].mxu0
  %v362 = vadd.f32 %v61, %v361
  %v363 = vpop.f32.mrb[0].mxu0
  %364 = vmatprep.mubr.f32.mxu0 0.0
  %365 = vmatmul.mubr.f32.gmra.mrb[0].mxu0 %v149
  %v366 = vpop.f32.mrb[0].mxu0
  %v367 = vadd.f32 %v61, %v366
  %v368 = vpop.f32.mrb[0].mxu0
  %369 = vmatprep.mubr.f32.mxu0 0.0
  %370 = vmatmul.mubr.f32.gmra.mrb[0].mxu0 %v152
  %v371 = vpop.f32.mrb[0].mxu0
  %v372 = vadd.f32 %v61, %v371
  %v373 = vpop.f32.mrb[0].mxu0
  %374 = vmatprep.mubr.f32.mxu0 0.0
  %375 = vmatmul.mubr.f32.gmra.mrb[0].mxu0 %v155
  %v376 = vpop.f32.mrb[0].mxu0
  %v377 = vadd.f32 %v61, %v376
  %v378 = vpop.f32.mrb[0].mxu0
  %379 = vmatprep.mubr.f32.mxu0 0.0
  %380 = vmatmul.mubr.f32.gmra.mrb[0].mxu0 %v158
  %v381 = vpop.f32.mrb[0].mxu0
  %v382 = vadd.f32 %v61, %v381
  %v383 = vpop.f32.mrb[0].mxu0
  %384 = vdwg.mxu0
  %v385 = vsub.f32 0.0, %v227
  %v386 = vsub.f32 0.0, %v232
  %v387 = vsub.f32 0.0, %v237
  %v388 = vsub.f32 0.0, %v242
  %v389 = vsub.f32 0.0, %v247
  %v390 = vsub.f32 0.0, %v252
  %v391 = vsub.f32 0.0, %v257
  %v392 = vsub.f32 0.0, %v262
  %v393 = vsub.f32 0.0, %v267
  %v394 = vsub.f32 0.0, %v272
  %v395 = vsub.f32 0.0, %v277
  %v396 = vsub.f32 0.0, %v282
  %v397 = vsub.f32 0.0, %v287
  %v398 = vsub.f32 0.0, %v292
  %v399 = vsub.f32 0.0, %v297
  %v400 = vsub.f32 0.0, %v302
  %v401 = vsub.f32 0.0, %v307
  %v402 = vsub.f32 0.0, %v312
  %v403 = vsub.f32 0.0, %v317
  %v404 = vsub.f32 0.0, %v322
  %v405 = vsub.f32 0.0, %v327
  %v406 = vsub.f32 0.0, %v332
  %v407 = vsub.f32 0.0, %v337
  %v408 = vsub.f32 0.0, %v342
  %v409 = vsub.f32 0.0, %v347
  %v410 = vsub.f32 0.0, %v352
  %v411 = vsub.f32 0.0, %v357
  %v412 = vsub.f32 0.0, %v362
  %v413 = vsub.f32 0.0, %v367
  %v414 = vsub.f32 0.0, %v372
  %v415 = vsub.f32 0.0, %v377
  %v416 = vsub.f32 0.0, %v382
  %v417 = vmul.f32 %v385, 1.442695
  %v418 = vpow.pop %v417
  %v419 = vmul.f32 %v386, 1.442695
  %v420 = vpow.pop %v419
  %v421 = vmul.f32 %v387, 1.442695
  %v422 = vpow.pop %v421
  %v423 = vmul.f32 %v388, 1.442695
  %v424 = vpow.pop %v423
  %v425 = vmul.f32 %v389, 1.442695
  %v426 = vpow.pop %v425
  %v427 = vmul.f32 %v390, 1.442695
  %v428 = vpow.pop %v427
  %v429 = vmul.f32 %v391, 1.442695
  %v430 = vpow.pop %v429
  %v431 = vmul.f32 %v392, 1.442695
  %v432 = vpow.pop %v431
  %v433 = vmul.f32 %v393, 1.442695
  %v434 = vpow.pop %v433
  %v435 = vmul.f32 %v394, 1.442695
  %v436 = vpow.pop %v435
  %v437 = vmul.f32 %v395, 1.442695
  %v438 = vpow.pop %v437
  %v439 = vmul.f32 %v396, 1.442695
  %v440 = vpow.pop %v439
  %v441 = vmul.f32 %v397, 1.442695
  %v442 = vpow.pop %v441
  %v443 = vmul.f32 %v398, 1.442695
  %v444 = vpow.pop %v443
  %v445 = vmul.f32 %v399, 1.442695
  %v446 = vpow.pop %v445
  %v447 = vmul.f32 %v400, 1.442695
  %v448 = vpow.pop %v447
  %v449 = vmul.f32 %v401, 1.442695
  %v450 = vpow.pop %v449
  %v451 = vmul.f32 %v402, 1.442695
  %v452 = vpow.pop %v451
  %v453 = vmul.f32 %v403, 1.442695
  %v454 = vpow.pop %v453
  %v455 = vmul.f32 %v404, 1.442695
  %v456 = vpow.pop %v455
  %v457 = vmul.f32 %v405, 1.442695
  %v458 = vpow.pop %v457
  %v459 = vmul.f32 %v406, 1.442695
  %v460 = vpow.pop %v459
  %v461 = vmul.f32 %v407, 1.442695
  %v462 = vpow.pop %v461
  %v463 = vmul.f32 %v408, 1.442695
  %v464 = vpow.pop %v463
  %v465 = vmul.f32 %v409, 1.442695
  %v466 = vpow.pop %v465
  %v467 = vmul.f32 %v410, 1.442695
  %v468 = vpow.pop %v467
  %v469 = vmul.f32 %v411, 1.442695
  %v470 = vpow.pop %v469
  %v471 = vmul.f32 %v412, 1.442695
  %v472 = vpow.pop %v471
  %v473 = vmul.f32 %v413, 1.442695
  %v474 = vpow.pop %v473
  %v475 = vmul.f32 %v414, 1.442695
  %v476 = vpow.pop %v475
  %v477 = vmul.f32 %v415, 1.442695
  %v478 = vpow.pop %v477
  %v479 = vmul.f32 %v416, 1.442695
  %v480 = vpow.pop %v479
  %v481 = vadd.f32 %v418, 1.0
  %v482 = vadd.f32 %v420, 1.0
  %v483 = vadd.f32 %v422, 1.0
  %v484 = vadd.f32 %v424, 1.0
  %v485 = vadd.f32 %v426, 1.0
  %v486 = vadd.f32 %v428, 1.0
  %v487 = vadd.f32 %v430, 1.0
  %v488 = vadd.f32 %v432, 1.0
  %v489 = vadd.f32 %v434, 1.0
  %v490 = vadd.f32 %v436, 1.0
  %v491 = vadd.f32 %v438, 1.0
  %v492 = vadd.f32 %v440, 1.0
  %v493 = vadd.f32 %v442, 1.0
  %v494 = vadd.f32 %v444, 1.0
  %v495 = vadd.f32 %v446, 1.0
  %v496 = vadd.f32 %v448, 1.0
  %v497 = vadd.f32 %v450, 1.0
  %v498 = vadd.f32 %v452, 1.0
  %v499 = vadd.f32 %v454, 1.0
  %v500 = vadd.f32 %v456, 1.0
  %v501 = vadd.f32 %v458, 1.0
  %v502 = vadd.f32 %v460, 1.0
  %v503 = vadd.f32 %v462, 1.0
  %v504 = vadd.f32 %v464, 1.0
  %v505 = vadd.f32 %v466, 1.0
  %v506 = vadd.f32 %v468, 1.0
  %v507 = vadd.f32 %v470, 1.0
  %v508 = vadd.f32 %v472, 1.0
  %v509 = vadd.f32 %v474, 1.0
  %v510 = vadd.f32 %v476, 1.0
  %v511 = vadd.f32 %v478, 1.0
  %v512 = vadd.f32 %v480, 1.0
  %v513 = vrcp.pop %v481
  %v514 = vrcp.pop %v482
  %v515 = vrcp.pop %v483
  %v516 = vrcp.pop %v484
  %v517 = vrcp.pop %v485
  %v518 = vrcp.pop %v486
  %v519 = vrcp.pop %v487
  %v520 = vrcp.pop %v488
  %v521 = vrcp.pop %v489
  %v522 = vrcp.pop %v490
  %v523 = vrcp.pop %v491
  %v524 = vrcp.pop %v492
  %v525 = vrcp.pop %v493
  %v526 = vrcp.pop %v494
  %v527 = vrcp.pop %v495
  %v528 = vrcp.pop %v496
  %v529 = vrcp.pop %v497
  %v530 = vrcp.pop %v498
  %v531 = vrcp.pop %v499
  %v532 = vrcp.pop %v500
  %v533 = vrcp.pop %v501
  %v534 = vrcp.pop %v502
  %v535 = vrcp.pop %v503
  %v536 = vrcp.pop %v504
  %v537 = vrcp.pop %v505
  %v538 = vrcp.pop %v506
  %v539 = vrcp.pop %v507
  %v540 = vrcp.pop %v508
  %v541 = vrcp.pop %v509
  %v542 = vrcp.pop %v510
  %v543 = vrcp.pop %v511
  %v544 = vrcp.pop %v512
  %v545 = vld [vmem:[%s3] sm:$0xff]
  %v546 = vld [vmem:[%s3 + $0x8] sm:$0xff]
  %v547 = vld [vmem:[%s3 + $0x10] sm:$0xff]
  %v548 = vld [vmem:[%s3 + $0x18] sm:$0xff]
  %v549 = vld [vmem:[%s3 + $0x20] sm:$0xff]
  %v550 = vld [vmem:[%s3 + $0x28] sm:$0xff]
  %v551 = vld [vmem:[%s3 + $0x30] sm:$0xff]
  %v552 = vld [vmem:[%s3 + $0x38] sm:$0xff]
  %v553 = vld [vmem:[%s3 + $0x40] sm:$0xff]
  %v554 = vld [vmem:[%s3 + $0x48] sm:$0xff]
  %v555 = vld [vmem:[%s3 + $0x50] sm:$0xff]
  %v556 = vld [vmem:[%s3 + $0x58] sm:$0xff]
  %v557 = vld [vmem:[%s3 + $0x60] sm:$0xff]
  %v558 = vld [vmem:[%s3 + $0x68] sm:$0xff]
  %v559 = vld [vmem:[%s3 + $0x70] sm:$0xff]
  %v560 = vld [vmem:[%s3 + $0x78] sm:$0xff]
  %v561 = vld [vmem:[%s4] sm:$0x1]
  %v563 = vlaneseq
  %v564 = vshrl.u32 %v563, 7
  %v565 = vsub.s32 0, %v564
  %v566 = vrot.slane %v561, %v565
  %568 = vmatprep.subr.mxu0 0.0
  %569 = vmatpush1.msra.mxu0 %v545
  %570 = vmatprep.subr.mxu0 0.0
  %571 = vmatpush1.msra.mxu0 %v546
  %572 = vmatprep.subr.mxu0 0.0
  %573 = vmatpush1.msra.mxu0 %v547
  %574 = vmatprep.subr.mxu0 0.0
  %575 = vmatpush1.msra.mxu0 %v548
  %576 = vmatprep.subr.mxu0 0.0
  %577 = vmatpush1.msra.mxu0 %v549
  %578 = vmatprep.subr.mxu0 0.0
  %579 = vmatpush1.msra.mxu0 %v550
  %580 = vmatprep.subr.mxu0 0.0
  %581 = vmatpush1.msra.mxu0 %v551
  %582 = vmatprep.subr.mxu0 0.0
  %583 = vmatpush1.msra.mxu0 %v552
  %584 = vmatprep.subr.mxu0 0.0
  %585 = vmatpush1.msra.mxu0 %v553
  %586 = vmatprep.subr.mxu0 0.0
  %587 = vmatpush1.msra.mxu0 %v554
  %588 = vmatprep.subr.mxu0 0.0
  %589 = vmatpush1.msra.mxu0 %v555
  %590 = vmatprep.subr.mxu0 0.0
  %591 = vmatpush1.msra.mxu0 %v556
  %592 = vmatprep.subr.mxu0 0.0
  %593 = vmatpush1.msra.mxu0 %v557
  %594 = vmatprep.subr.mxu0 0.0
  %595 = vmatpush1.msra.mxu0 %v558
  %596 = vmatprep.subr.mxu0 0.0
  %597 = vmatpush1.msra.mxu0 %v559
  %598 = vmatprep.subr.mxu0 0.0
  %599 = vmatpush1.msra.mxu0 %v560
  %600 = vmatprep.subr.mxu0 0.0
  %601 = vmatpush1.msra.mxu0 0.0
  %602 = vmatprep.subr.mxu0 0.0
  %603 = vmatpush1.msra.mxu0 0.0
  %604 = vmatprep.subr.mxu0 0.0
  %605 = vmatpush1.msra.mxu0 0.0
  %606 = vmatprep.subr.mxu0 0.0
  %607 = vmatpush1.msra.mxu0 0.0
  %608 = vmatprep.subr.mxu0 0.0
  %609 = vmatpush1.msra.mxu0 0.0
  %610 = vmatprep.subr.mxu0 0.0
  %611 = vmatpush1.msra.mxu0 0.0
  %612 = vmatprep.subr.mxu0 0.0
  %613 = vmatpush1.msra.mxu0 0.0
  %614 = vmatprep.subr.mxu0 0.0
  %615 = vmatpush1.msra.mxu0 0.0
  %616 = vmatprep.subr.mxu0 0.0
  %617 = vmatpush1.msra.mxu0 0.0
  %618 = vmatprep.subr.mxu0 0.0
  %619 = vmatpush1.msra.mxu0 0.0
  %620 = vmatprep.subr.mxu0 0.0
  %621 = vmatpush1.msra.mxu0 0.0
  %622 = vmatprep.subr.mxu0 0.0
  %623 = vmatpush1.msra.mxu0 0.0
  %624 = vmatprep.subr.mxu0 0.0
  %625 = vmatpush1.msra.mxu0 0.0
  %626 = vmatprep.subr.mxu0 0.0
  %627 = vmatpush1.msra.mxu0 0.0
  %628 = vmatprep.subr.mxu0 0.0
  %629 = vmatpush1.msra.mxu0 0.0
  %630 = vmatprep.subr.mxu0 0.0
  %631 = vmatpush1.msra.mxu0 0.0
  %632 = vmatprep.mubr.f32.mxu0 0.0
  %633 = vmatmul.mubr.f32.gmra.mrb[0].mxu0 %v513
  %v634 = vpop.f32.mrb[0].mxu0
  %v635 = vadd.f32 %v566, %v634
  %v636 = vpop.f32.mrb[0].mxu0
  %637 = vmatprep.mubr.f32.mxu0 0.0
  %638 = vmatmul.mubr.f32.gmra.mrb[0].mxu0 %v514
  %v639 = vpop.f32.mrb[0].mxu0
  %v640 = vadd.f32 %v566, %v639
  %v641 = vpop.f32.mrb[0].mxu0
  %642 = vmatprep.mubr.f32.mxu0 0.0
  %643 = vmatmul.mubr.f32.gmra.mrb[0].mxu0 %v515
  %v644 = vpop.f32.mrb[0].mxu0
  %v645 = vadd.f32 %v566, %v644
  %v646 = vpop.f32.mrb[0].mxu0
  %647 = vmatprep.mubr.f32.mxu0 0.0
  %648 = vmatmul.mubr.f32.gmra.mrb[0].mxu0 %v516
  %v649 = vpop.f32.mrb[0].mxu0
  %v650 = vadd.f32 %v566, %v649
  %v651 = vpop.f32.mrb[0].mxu0
  %652 = vmatprep.mubr.f32.mxu0 0.0
  %653 = vmatmul.mubr.f32.gmra.mrb[0].mxu0 %v517
  %v654 = vpop.f32.mrb[0].mxu0
  %v655 = vadd.f32 %v566, %v654
  %v656 = vpop.f32.mrb[0].mxu0
  %657 = vmatprep.mubr.f32.mxu0 0.0
  %658 = vmatmul.mubr.f32.gmra.mrb[0].mxu0 %v518
  %v659 = vpop.f32.mrb[0].mxu0
  %v660 = vadd.f32 %v566, %v659
  %v661 = vpop.f32.mrb[0].mxu0
  %662 = vmatprep.mubr.f32.mxu0 0.0
  %663 = vmatmul.mubr.f32.gmra.mrb[0].mxu0 %v519
  %v664 = vpop.f32.mrb[0].mxu0
  %v665 = vadd.f32 %v566, %v664
  %v666 = vpop.f32.mrb[0].mxu0
  %667 = vmatprep.mubr.f32.mxu0 0.0
  %668 = vmatmul.mubr.f32.gmra.mrb[0].mxu0 %v520
  %v669 = vpop.f32.mrb[0].mxu0
  %v670 = vadd.f32 %v566, %v669
  %v671 = vpop.f32.mrb[0].mxu0
  %672 = vmatprep.mubr.f32.mxu0 0.0
  %673 = vmatmul.mubr.f32.gmra.mrb[0].mxu0 %v521
  %v674 = vpop.f32.mrb[0].mxu0
  %v675 = vadd.f32 %v566, %v674
  %v676 = vpop.f32.mrb[0].mxu0
  %677 = vmatprep.mubr.f32.mxu0 0.0
  %678 = vmatmul.mubr.f32.gmra.mrb[0].mxu0 %v522
  %v679 = vpop.f32.mrb[0].mxu0
  %v680 = vadd.f32 %v566, %v679
  %v681 = vpop.f32.mrb[0].mxu0
  %682 = vmatprep.mubr.f32.mxu0 0.0
  %683 = vmatmul.mubr.f32.gmra.mrb[0].mxu0 %v523
  %v684 = vpop.f32.mrb[0].mxu0
  %v685 = vadd.f32 %v566, %v684
  %v686 = vpop.f32.mrb[0].mxu0
  %687 = vmatprep.mubr.f32.mxu0 0.0
  %688 = vmatmul.mubr.f32.gmra.mrb[0].mxu0 %v524
  %v689 = vpop.f32.mrb[0].mxu0
  %v690 = vadd.f32 %v566, %v689
  %v691 = vpop.f32.mrb[0].mxu0
  %692 = vmatprep.mubr.f32.mxu0 0.0
  %693 = vmatmul.mubr.f32.gmra.mrb[0].mxu0 %v525
  %v694 = vpop.f32.mrb[0].mxu0
  %v695 = vadd.f32 %v566, %v694
  %v696 = vpop.f32.mrb[0].mxu0
  %697 = vmatprep.mubr.f32.mxu0 0.0
  %698 = vmatmul.mubr.f32.gmra.mrb[0].mxu0 %v526
  %v699 = vpop.f32.mrb[0].mxu0
  %v700 = vadd.f32 %v566, %v699
  %v701 = vpop.f32.mrb[0].mxu0
  %702 = vmatprep.mubr.f32.mxu0 0.0
  %703 = vmatmul.mubr.f32.gmra.mrb[0].mxu0 %v527
  %v704 = vpop.f32.mrb[0].mxu0
  %v705 = vadd.f32 %v566, %v704
  %v706 = vpop.f32.mrb[0].mxu0
  %707 = vmatprep.mubr.f32.mxu0 0.0
  %708 = vmatmul.mubr.f32.gmra.mrb[0].mxu0 %v528
  %v709 = vpop.f32.mrb[0].mxu0
  %v710 = vadd.f32 %v566, %v709
  %v711 = vpop.f32.mrb[0].mxu0
  %712 = vmatprep.mubr.f32.mxu0 0.0
  %713 = vmatmul.mubr.f32.gmra.mrb[0].mxu0 %v529
  %v714 = vpop.f32.mrb[0].mxu0
  %v715 = vadd.f32 %v566, %v714
  %v716 = vpop.f32.mrb[0].mxu0
  %717 = vmatprep.mubr.f32.mxu0 0.0
  %718 = vmatmul.mubr.f32.gmra.mrb[0].mxu0 %v530
  %v719 = vpop.f32.mrb[0].mxu0
  %v720 = vadd.f32 %v566, %v719
  %v721 = vpop.f32.mrb[0].mxu0
  %722 = vmatprep.mubr.f32.mxu0 0.0
  %723 = vmatmul.mubr.f32.gmra.mrb[0].mxu0 %v531
  %v724 = vpop.f32.mrb[0].mxu0
  %v725 = vadd.f32 %v566, %v724
  %v726 = vpop.f32.mrb[0].mxu0
  %727 = vmatprep.mubr.f32.mxu0 0.0
  %728 = vmatmul.mubr.f32.gmra.mrb[0].mxu0 %v532
  %v729 = vpop.f32.mrb[0].mxu0
  %v730 = vadd.f32 %v566, %v729
  %v731 = vpop.f32.mrb[0].mxu0
  %732 = vmatprep.mubr.f32.mxu0 0.0
  %733 = vmatmul.mubr.f32.gmra.mrb[0].mxu0 %v533
  %v734 = vpop.f32.mrb[0].mxu0
  %v735 = vadd.f32 %v566, %v734
  %v736 = vpop.f32.mrb[0].mxu0
  %737 = vmatprep.mubr.f32.mxu0 0.0
  %738 = vmatmul.mubr.f32.gmra.mrb[0].mxu0 %v534
  %v739 = vpop.f32.mrb[0].mxu0
  %v740 = vadd.f32 %v566, %v739
  %v741 = vpop.f32.mrb[0].mxu0
  %742 = vmatprep.mubr.f32.mxu0 0.0
  %743 = vmatmul.mubr.f32.gmra.mrb[0].mxu0 %v535
  %v744 = vpop.f32.mrb[0].mxu0
  %v745 = vadd.f32 %v566, %v744
  %v746 = vpop.f32.mrb[0].mxu0
  %747 = vmatprep.mubr.f32.mxu0 0.0
  %748 = vmatmul.mubr.f32.gmra.mrb[0].mxu0 %v536
  %v749 = vpop.f32.mrb[0].mxu0
  %v750 = vadd.f32 %v566, %v749
  %v751 = vpop.f32.mrb[0].mxu0
  %752 = vmatprep.mubr.f32.mxu0 0.0
  %753 = vmatmul.mubr.f32.gmra.mrb[0].mxu0 %v537
  %v754 = vpop.f32.mrb[0].mxu0
  %v755 = vadd.f32 %v566, %v754
  %v756 = vpop.f32.mrb[0].mxu0
  %757 = vmatprep.mubr.f32.mxu0 0.0
  %758 = vmatmul.mubr.f32.gmra.mrb[0].mxu0 %v538
  %v759 = vpop.f32.mrb[0].mxu0
  %v760 = vadd.f32 %v566, %v759
  %v761 = vpop.f32.mrb[0].mxu0
  %762 = vmatprep.mubr.f32.mxu0 0.0
  %763 = vmatmul.mubr.f32.gmra.mrb[0].mxu0 %v539
  %v764 = vpop.f32.mrb[0].mxu0
  %v765 = vadd.f32 %v566, %v764
  %v766 = vpop.f32.mrb[0].mxu0
  %767 = vmatprep.mubr.f32.mxu0 0.0
  %768 = vmatmul.mubr.f32.gmra.mrb[0].mxu0 %v540
  %v769 = vpop.f32.mrb[0].mxu0
  %v770 = vadd.f32 %v566, %v769
  %v771 = vpop.f32.mrb[0].mxu0
  %772 = vmatprep.mubr.f32.mxu0 0.0
  %773 = vmatmul.mubr.f32.gmra.mrb[0].mxu0 %v541
  %v774 = vpop.f32.mrb[0].mxu0
  %v775 = vadd.f32 %v566, %v774
  %v776 = vpop.f32.mrb[0].mxu0
  %777 = vmatprep.mubr.f32.mxu0 0.0
  %778 = vmatmul.mubr.f32.gmra.mrb[0].mxu0 %v542
  %v779 = vpop.f32.mrb[0].mxu0
  %v780 = vadd.f32 %v566, %v779
  %v781 = vpop.f32.mrb[0].mxu0
  %782 = vmatprep.mubr.f32.mxu0 0.0
  %783 = vmatmul.mubr.f32.gmra.mrb[0].mxu0 %v543
  %v784 = vpop.f32.mrb[0].mxu0
  %v785 = vadd.f32 %v566, %v784
  %v786 = vpop.f32.mrb[0].mxu0
  %787 = vmatprep.mubr.f32.mxu0 0.0
  %788 = vmatmul.mubr.f32.gmra.mrb[0].mxu0 %v544
  %v789 = vpop.f32.mrb[0].mxu0
  %v790 = vadd.f32 %v566, %v789
  %v791 = vpop.f32.mrb[0].mxu0
  %792 = vdwg.mxu0
  %v793 = vsub.f32 0.0, %v635
  %v794 = vsub.f32 0.0, %v640
  %v795 = vsub.f32 0.0, %v645
  %v796 = vsub.f32 0.0, %v650
  %v797 = vsub.f32 0.0, %v655
  %v798 = vsub.f32 0.0, %v660
  %v799 = vsub.f32 0.0, %v665
  %v800 = vsub.f32 0.0, %v670
  %v801 = vsub.f32 0.0, %v675
  %v802 = vsub.f32 0.0, %v680
  %v803 = vsub.f32 0.0, %v685
  %v804 = vsub.f32 0.0, %v690
  %v805 = vsub.f32 0.0, %v695
  %v806 = vsub.f32 0.0, %v700
  %v807 = vsub.f32 0.0, %v705
  %v808 = vsub.f32 0.0, %v710
  %v809 = vsub.f32 0.0, %v715
  %v810 = vsub.f32 0.0, %v720
  %v811 = vsub.f32 0.0, %v725
  %v812 = vsub.f32 0.0, %v730
  %v813 = vsub.f32 0.0, %v735
  %v814 = vsub.f32 0.0, %v740
  %v815 = vsub.f32 0.0, %v745
  %v816 = vsub.f32 0.0, %v750
  %v817 = vsub.f32 0.0, %v755
  %v818 = vsub.f32 0.0, %v760
  %v819 = vsub.f32 0.0, %v765
  %v820 = vsub.f32 0.0, %v770
  %v821 = vsub.f32 0.0, %v775
  %v822 = vsub.f32 0.0, %v780
  %v823 = vsub.f32 0.0, %v785
  %v824 = vsub.f32 0.0, %v790
  %v825 = vmul.f32 %v793, 1.442695
  %v826 = vpow.pop %v825
  %v827 = vmul.f32 %v794, 1.442695
  %v828 = vpow.pop %v827
  %v829 = vmul.f32 %v795, 1.442695
  %v830 = vpow.pop %v829
  %v831 = vmul.f32 %v796, 1.442695
  %v832 = vpow.pop %v831
  %v833 = vmul.f32 %v797, 1.442695
  %v834 = vpow.pop %v833
  %v835 = vmul.f32 %v798, 1.442695
  %v836 = vpow.pop %v835
  %v837 = vmul.f32 %v799, 1.442695
  %v838 = vpow.pop %v837
  %v839 = vmul.f32 %v800, 1.442695
  %v840 = vpow.pop %v839
  %v841 = vmul.f32 %v801, 1.442695
  %v842 = vpow.pop %v841
  %v843 = vmul.f32 %v802, 1.442695
  %v844 = vpow.pop %v843
  %v845 = vmul.f32 %v803, 1.442695
  %v846 = vpow.pop %v845
  %v847 = vmul.f32 %v804, 1.442695
  %v848 = vpow.pop %v847
  %v849 = vmul.f32 %v805, 1.442695
  %v850 = vpow.pop %v849
  %v851 = vmul.f32 %v806, 1.442695
  %v852 = vpow.pop %v851
  %v853 = vmul.f32 %v807, 1.442695
  %v854 = vpow.pop %v853
  %v855 = vmul.f32 %v808, 1.442695
  %v856 = vpow.pop %v855
  %v857 = vmul.f32 %v809, 1.442695
  %v858 = vpow.pop %v857
  %v859 = vmul.f32 %v810, 1.442695
  %v860 = vpow.pop %v859
  %v861 = vmul.f32 %v811, 1.442695
  %v862 = vpow.pop %v861
  %v863 = vmul.f32 %v812, 1.442695
  %v864 = vpow.pop %v863
  %v865 = vmul.f32 %v813, 1.442695
  %v866 = vpow.pop %v865
  %v867 = vmul.f32 %v814, 1.442695
  %v868 = vpow.pop %v867
  %v869 = vmul.f32 %v815, 1.442695
  %v870 = vpow.pop %v869
  %v871 = vmul.f32 %v816, 1.442695
  %v872 = vpow.pop %v871
  %v873 = vmul.f32 %v817, 1.442695
  %v874 = vpow.pop %v873
  %v875 = vmul.f32 %v818, 1.442695
  %v876 = vpow.pop %v875
  %v877 = vmul.f32 %v819, 1.442695
  %v878 = vpow.pop %v877
  %v879 = vmul.f32 %v820, 1.442695
  %v880 = vpow.pop %v879
  %v881 = vmul.f32 %v821, 1.442695
  %v882 = vpow.pop %v881
  %v883 = vmul.f32 %v822, 1.442695
  %v884 = vpow.pop %v883
  %v885 = vmul.f32 %v823, 1.442695
  %v886 = vpow.pop %v885
  %v887 = vmul.f32 %v824, 1.442695
  %v888 = vpow.pop %v887
  %v889 = vadd.f32 %v826, 1.0
  %v890 = vadd.f32 %v828, 1.0
  %v891 = vadd.f32 %v830, 1.0
  %v892 = vadd.f32 %v832, 1.0
  %v893 = vadd.f32 %v834, 1.0
  %v894 = vadd.f32 %v836, 1.0
  %v895 = vadd.f32 %v838, 1.0
  %v896 = vadd.f32 %v840, 1.0
  %v897 = vadd.f32 %v842, 1.0
  %v898 = vadd.f32 %v844, 1.0
  %v899 = vadd.f32 %v846, 1.0
  %v900 = vadd.f32 %v848, 1.0
  %v901 = vadd.f32 %v850, 1.0
  %v902 = vadd.f32 %v852, 1.0
  %v903 = vadd.f32 %v854, 1.0
  %v904 = vadd.f32 %v856, 1.0
  %v905 = vadd.f32 %v858, 1.0
  %v906 = vadd.f32 %v860, 1.0
  %v907 = vadd.f32 %v862, 1.0
  %v908 = vadd.f32 %v864, 1.0
  %v909 = vadd.f32 %v866, 1.0
  %v910 = vadd.f32 %v868, 1.0
  %v911 = vadd.f32 %v870, 1.0
  %v912 = vadd.f32 %v872, 1.0
  %v913 = vadd.f32 %v874, 1.0
  %v914 = vadd.f32 %v876, 1.0
  %v915 = vadd.f32 %v878, 1.0
  %v916 = vadd.f32 %v880, 1.0
  %v917 = vadd.f32 %v882, 1.0
  %v918 = vadd.f32 %v884, 1.0
  %v919 = vadd.f32 %v886, 1.0
  %v920 = vadd.f32 %v888, 1.0
  %v921 = vrcp.pop %v889
  %v922 = vrcp.pop %v890
  %v923 = vrcp.pop %v891
  %v924 = vrcp.pop %v892
  %v925 = vrcp.pop %v893
  %v926 = vrcp.pop %v894
  %v927 = vrcp.pop %v895
  %v928 = vrcp.pop %v896
  %v929 = vrcp.pop %v897
  %v930 = vrcp.pop %v898
  %v931 = vrcp.pop %v899
  %v932 = vrcp.pop %v900
  %v933 = vrcp.pop %v901
  %v934 = vrcp.pop %v902
  %v935 = vrcp.pop %v903
  %v936 = vrcp.pop %v904
  %v937 = vrcp.pop %v905
  %v938 = vrcp.pop %v906
  %v939 = vrcp.pop %v907
  %v940 = vrcp.pop %v908
  %v941 = vrcp.pop %v909
  %v942 = vrcp.pop %v910
  %v943 = vrcp.pop %v911
  %v944 = vrcp.pop %v912
  %v945 = vrcp.pop %v913
  %v946 = vrcp.pop %v914
  %v947 = vrcp.pop %v915
  %v948 = vrcp.pop %v916
  %v949 = vrcp.pop %v917
  %v950 = vrcp.pop %v918
  %v951 = vrcp.pop %v919
  %v952 = vrcp.pop %v920
  %953 = vst.msk [vmem:[%s5] sm:$0xff] %vm63, %v921
  %954 = vst.msk [vmem:[%s5 + $0x8] sm:$0xff] %vm63, %v922
  %955 = vst.msk [vmem:[%s5 + $0x10] sm:$0xff] %vm63, %v923
  %956 = vst.msk [vmem:[%s5 + $0x18] sm:$0xff] %vm63, %v924
  %957 = vst.msk [vmem:[%s5 + $0x20] sm:$0xff] %vm63, %v925
  %958 = vst.msk [vmem:[%s5 + $0x28] sm:$0xff] %vm63, %v926
  %959 = vst.msk [vmem:[%s5 + $0x30] sm:$0xff] %vm63, %v927
  %960 = vst.msk [vmem:[%s5 + $0x38] sm:$0xff] %vm63, %v928
  %961 = vst.msk [vmem:[%s5 + $0x40] sm:$0xff] %vm63, %v929
  %962 = vst.msk [vmem:[%s5 + $0x48] sm:$0xff] %vm63, %v930
  %963 = vst.msk [vmem:[%s5 + $0x50] sm:$0xff] %vm63, %v931
  %964 = vst.msk [vmem:[%s5 + $0x58] sm:$0xff] %vm63, %v932
  %965 = vst.msk [vmem:[%s5 + $0x60] sm:$0xff] %vm63, %v933
  %966 = vst.msk [vmem:[%s5 + $0x68] sm:$0xff] %vm63, %v934
  %967 = vst.msk [vmem:[%s5 + $0x70] sm:$0xff] %vm63, %v935
  %968 = vst.msk [vmem:[%s5 + $0x78] sm:$0xff] %vm63, %v936
  %969 = vst.msk [vmem:[%s5 + $0x80] sm:$0xff] %vm63, %v937
  %970 = vst.msk [vmem:[%s5 + $0x88] sm:$0xff] %vm63, %v938
  %971 = vst.msk [vmem:[%s5 + $0x90] sm:$0xff] %vm63, %v939
  %972 = vst.msk [vmem:[%s5 + $0x98] sm:$0xff] %vm63, %v940
  %973 = vst.msk [vmem:[%s5 + $0xa0] sm:$0xff] %vm63, %v941
  %974 = vst.msk [vmem:[%s5 + $0xa8] sm:$0xff] %vm63, %v942
  %975 = vst.msk [vmem:[%s5 + $0xb0] sm:$0xff] %vm63, %v943
  %976 = vst.msk [vmem:[%s5 + $0xb8] sm:$0xff] %vm63, %v944
  %977 = vst.msk [vmem:[%s5 + $0xc0] sm:$0xff] %vm63, %v945
  %978 = vst.msk [vmem:[%s5 + $0xc8] sm:$0xff] %vm63, %v946
  %979 = vst.msk [vmem:[%s5 + $0xd0] sm:$0xff] %vm63, %v947
  %980 = vst.msk [vmem:[%s5 + $0xd8] sm:$0xff] %vm63, %v948
  %981 = vst.msk [vmem:[%s5 + $0xe0] sm:$0xff] %vm63, %v949
  %982 = vst.msk [vmem:[%s5 + $0xe8] sm:$0xff] %vm63, %v950
  %983 = vst.msk [vmem:[%s5 + $0xf0] sm:$0xff] %vm63, %v951
  %984 = vst.msk [vmem:[%s5 + $0xf8] sm:$0xff] %vm63, %v952
  // Predicated region
  $region22: #{ffnn_forward.1} parent=0 // pred_check
    _
  $region23: #{ffnn_forward.1} parent=0 // pred_check_branch
    %986 = sbr.rel (0) target = $region25
  $region24: #{ffnn_forward.1} parent=0 // pred_region
    _
  $region25: #{ffnn_forward.1} parent=0 // pred_fallthru
    _
  // Predicated region
  $region26: #{ffnn_forward.1} parent=0 // pred_check
    _
  $region27: #{ffnn_forward.1} parent=0 // pred_check_branch
    %988 = sbr.rel (0) target = $region29
  $region28: #{ffnn_forward.1} parent=0 // pred_region
    _
  $region29: #{ffnn_forward.1} parent=0 // pred_fallthru
    _

</llo_original>
